<compile_context>
chip_gen: v7x
topology: tpu7x:2x2x1
jax: 0.10.0
libtpu: 0.0.40
codegen_flags: <defaults>
</compile_context>

<pallas_src>
import functools
import math

import jax
import jax.numpy as jnp
from jax.experimental import pallas as pl
from jax.experimental.pallas import tpu as pltpu

BN_EPS = 1e-5
_STREAM_BUDGET = 24 * 1024 * 1024   # target for double-buffered weight streams


def _round_up(x, m):
    return (x + m - 1) // m * m


def _plan_hidden_tiling(D, H):
    """Pick the hidden-dim tile width th (fc1 N-dim / fc2 K-dim).

    Per grid step we stream a (D, th) w1 tile and a (th, D) w2 tile, both bf16
    and double-buffered -> 8*D*th bytes.  Keep that under ~24 MiB so the whole
    kernel (plus resident x / output / vectors) fits v7x's 64 MiB VMEM; v5e and
    v6e (128 MiB) fit trivially.  When the full weights fit the budget we use a
    single tile and avoid any host-side padding of H.
    Returns (Hp, th, n_h)."""
    if 8 * D * H <= _STREAM_BUDGET:
        return H, H, 1
    th = max(128, min(2048, (_STREAM_BUDGET // (8 * D)) // 128 * 128))
    Hp = _round_up(H, th)
    return Hp, th, Hp // th


def _fusion_net_kernel(x_ref, w1_ref, gamma_ref, beta_ref, w2_ref, b2_ref,
                       o_ref, *, batch, th, n_h):
    """Grid = (n_h,): one hidden-dim tile per step (fc2 contraction axis)."""
    k = pl.program_id(0)

    @pl.when(k == 0)
    def _init():
        o_ref[...] = jnp.zeros_like(o_ref)

    # ---- fc1 for this hidden tile: (B, D)bf16 @ (D, th)bf16 -> f32 ----
    # b1 is omitted on purpose: a per-feature constant added before
    # training-mode BatchNorm is exactly cancelled by the mean subtraction.
    h = jnp.dot(x_ref[...], w1_ref[...], preferred_element_type=jnp.float32)

    # ---- BatchNorm1d (training-mode batch stats), two-pass variance ----
    inv_n = jnp.float32(1.0 / batch)
    mean = jnp.sum(h, axis=0, keepdims=True) * inv_n          # (1, th)
    d = h - mean
    var = jnp.sum(d * d, axis=0, keepdims=True) * inv_n       # biased variance
    inv_std = jax.lax.rsqrt(var + BN_EPS)

    if n_h == 1:
        gamma = gamma_ref[...]
        beta = beta_ref[...]
    else:
        off = pl.multiple_of(k * th, 128)
        gamma = gamma_ref[:, pl.ds(off, th)]
        beta = beta_ref[:, pl.ds(off, th)]
    gamma = gamma.astype(jnp.float32)
    beta = beta.astype(jnp.float32)

    # ---- normalize + ReLU (f32 elementwise on the VPU) ----
    h = jnp.maximum(d * (gamma * inv_std) + beta, 0.0)

    # ---- fc2 partial: accumulate into the resident f32 output block ----
    o_ref[...] += jnp.dot(h.astype(w2_ref.dtype), w2_ref[...],
                          preferred_element_type=jnp.float32)

    @pl.when(k == pl.num_programs(0) - 1)
    def _finalize():
        o_ref[...] += b2_ref[...].astype(jnp.float32)


def prepare_params(params):
    """One-time parameter preprocessing (hoisted out of the per-call forward):
    pad the hidden dim only if it must be tiled, cast MXU operands to bf16."""
    D, H = params["w1"].shape
    Hp, th, n_h = _plan_hidden_tiling(D, H)
    pad_h = Hp - H
    return {
        "w1": jnp.pad(params["w1"], ((0, 0), (0, pad_h))).astype(jnp.bfloat16),
        "w2": jnp.pad(params["w2"], ((0, pad_h), (0, 0))).astype(jnp.bfloat16),
        "gamma": jnp.pad(params["gamma"], ((0, 0), (0, pad_h))),
        "beta": jnp.pad(params["beta"], ((0, 0), (0, pad_h))),
        "b2": params["b2"],
        "D": D, "H": H, "Hp": Hp, "th": th, "n_h": n_h,
    }


def fusion_net_forward(x, prep):
    """x: (B, D) float32. prep: output of prepare_params()."""
    B, D = x.shape
    assert D == prep["D"]
    Hp, th, n_h = prep["Hp"], prep["th"], prep["n_h"]

    xb = x.astype(jnp.bfloat16)   # per-call activation cast (weights pre-cast)

    kernel = functools.partial(_fusion_net_kernel, batch=B, th=th, n_h=n_h)

    # VMEM footprint: resident x / output / vectors + double-buffered weight tiles.
    vmem_bytes = (B * D * 2 + B * D * 4 + 2 * Hp * 4 + D * 4
                  + 2 * (D * th * 2) + 2 * (th * D * 2))
    vmem_limit = int(min(max(vmem_bytes + (8 << 20), 16 << 20), 100 << 20))

    flops = 4 * B * D * Hp                                   # fc1 + fc2
    bytes_accessed = (B * D * 2            # x (bf16)
                      + 2 * D * Hp * 2     # w1 + w2, each read exactly once
                      + 2 * Hp * 4         # gamma + beta
                      + D * 4              # b2
                      + B * D * 4)         # output

    return pl.pallas_call(
        kernel,
        out_shape=jax.ShapeDtypeStruct((B, D), jnp.float32),
        grid_spec=pltpu.PrefetchScalarGridSpec(
            num_scalar_prefetch=0,
            grid=(n_h,),
            in_specs=[
                pl.BlockSpec((B, D), lambda k: (0, 0)),      # x       (resident)
                pl.BlockSpec((D, th), lambda k: (0, k)),     # w1 tile (streamed)
                pl.BlockSpec((1, Hp), lambda k: (0, 0)),     # gamma   (resident)
                pl.BlockSpec((1, Hp), lambda k: (0, 0)),     # beta    (resident)
                pl.BlockSpec((th, D), lambda k: (k, 0)),     # w2 tile (streamed)
                pl.BlockSpec((1, D), lambda k: (0, 0)),      # b2      (resident)
            ],
            out_specs=pl.BlockSpec((B, D), lambda k: (0, 0)),
        ),
        compiler_params=pltpu.CompilerParams(
            dimension_semantics=("arbitrary",),
            vmem_limit_bytes=vmem_limit,
        ),
        cost_estimate=pl.CostEstimate(
            flops=flops,
            transcendentals=Hp,                              # rsqrt per feature
            bytes_accessed=bytes_accessed,
        ),
    )(xb, prep["w1"], prep["gamma"], prep["beta"], prep["w2"], prep["b2"])


def init_params(key, input_dim):
    """Deterministic init mirroring nn.Linear defaults (uniform +/- 1/sqrt(fan_in))
    and BatchNorm1d defaults (gamma=1, beta=0). Weights stored transposed vs torch."""
    hidden_dim = math.floor(input_dim * 1.5)
    k1, k2, k3, k4 = jax.random.split(key, 4)

    lim1 = 1.0 / math.sqrt(input_dim)
    lim2 = 1.0 / math.sqrt(hidden_dim)

    w1 = jax.random.uniform(k1, (input_dim, hidden_dim), jnp.float32, -lim1, lim1)
    b1 = jax.random.uniform(k2, (1, hidden_dim), jnp.float32, -lim1, lim1)
    w2 = jax.random.uniform(k3, (hidden_dim, input_dim), jnp.float32, -lim2, lim2)
    b2 = jax.random.uniform(k4, (1, input_dim), jnp.float32, -lim2, lim2)

    gamma = jnp.ones((1, hidden_dim), jnp.float32)
    beta = jnp.zeros((1, hidden_dim), jnp.float32)

    return {"w1": w1, "b1": b1, "gamma": gamma, "beta": beta,
            "w2": w2, "b2": b2}


def _reference(x, p):
    """Pure-JAX f32 reference (keeps the b1 add to verify its exact cancellation
    by the training-mode mean subtraction)."""
    h = x @ p["w1"] + p["b1"]
    mean = h.mean(axis=0, keepdims=True)
    var = ((h - mean) ** 2).mean(axis=0, keepdims=True)
    h = (h - mean) / jnp.sqrt(var + BN_EPS) * p["gamma"] + p["beta"]
    h = jnp.maximum(h, 0.0)
    return h @ p["w2"] + p["b2"]


if __name__ == "__main__":
    key = jax.random.PRNGKey(0)
    kx, kp = jax.random.split(key)

    batch = 8
    input_dim = 32          # -> hidden_dim = 48

    x = jax.random.normal(kx, (batch, input_dim), jnp.float32)
    params = init_params(kp, input_dim)
    prep = prepare_params(params)          # one-time pad + bf16 cast (hoisted)

    out = fusion_net_forward(x, prep)
    out = jax.block_until_ready(out)

    ref = _reference(x, params)
    assert out.shape == (batch, input_dim)
    # bf16 MXU inputs (f32 accumulation) vs a pure-f32 reference -> relaxed tol.
    assert jnp.allclose(out, ref, atol=5e-2, rtol=5e-2), \
        f"max abs err {jnp.max(jnp.abs(out - ref))}"

    print("KERNEL_OK")
</pallas_src>

<mosaic_0001>
module attributes {stable_mosaic.version = 11 : i64} {
  func.func @_fusion_net_kernel(%arg0: i32, %arg1: memref<8x32xbf16, #tpu.memory_space<vmem>>, %arg2: memref<32x48xbf16, #tpu.memory_space<vmem>>, %arg3: memref<1x48xf32, #tpu.memory_space<vmem>>, %arg4: memref<1x48xf32, #tpu.memory_space<vmem>>, %arg5: memref<48x32xbf16, #tpu.memory_space<vmem>>, %arg6: memref<1x32xf32, #tpu.memory_space<vmem>>, %arg7: memref<8x32xf32, #tpu.memory_space<vmem>>) attributes {dimension_semantics = [#tpu.dimension_semantics<arbitrary>], iteration_bounds = array<i64: 1>, scalar_prefetch = 0 : i64, scratch_operands = 0 : i64, tpu.core_type = #tpu.core_type<tc>, window_params = [{pipeline_mode = #tpu.pipeline_mode<synchronous>, transform_indices = @transform_0, window_bounds = array<i64: 8, 32>}, {transform_indices = @transform_1, window_bounds = array<i64: 32, 48>}, {pipeline_mode = #tpu.pipeline_mode<synchronous>, transform_indices = @transform_2, window_bounds = array<i64: 1, 48>}, {pipeline_mode = #tpu.pipeline_mode<synchronous>, transform_indices = @transform_3, window_bounds = array<i64: 1, 48>}, {transform_indices = @transform_4, window_bounds = array<i64: 48, 32>}, {pipeline_mode = #tpu.pipeline_mode<synchronous>, transform_indices = @transform_5, window_bounds = array<i64: 1, 32>}, {pipeline_mode = #tpu.pipeline_mode<synchronous>, transform_indices = @transform_6, window_bounds = array<i64: 8, 32>}]} {
    %c0_i32 = arith.constant 0 : i32
    %0 = arith.cmpi eq, %arg0, %c0_i32 : i32
    %1 = arith.extui %0 : i1 to i32
    %c0_i32_0 = arith.constant 0 : i32
    %2 = arith.cmpi ne, %1, %c0_i32_0 : i32
    scf.if %2 {
      %cst_23 = arith.constant 0.000000e+00 : f32
      %38 = vector.broadcast %cst_23 : f32 to vector<8x32xf32>
      %c0_24 = arith.constant 0 : index
      %c0_25 = arith.constant 0 : index
      %39 = vector.load %arg7[%c0_24, %c0_25] : memref<8x32xf32, #tpu.memory_space<vmem>>, vector<8x32xf32>
      tpu.vector_store %arg7[%c0_24, %c0_25], %38 {strides = array<i32>} : memref<8x32xf32, #tpu.memory_space<vmem>>, vector<8x32xf32>,
    } else {
    }
    %c0 = arith.constant 0 : index
    %c0_1 = arith.constant 0 : index
    %3 = vector.load %arg1[%c0, %c0_1] : memref<8x32xbf16, #tpu.memory_space<vmem>>, vector<8x32xbf16>
    %c0_2 = arith.constant 0 : index
    %c0_3 = arith.constant 0 : index
    %4 = vector.load %arg2[%c0_2, %c0_3] : memref<32x48xbf16, #tpu.memory_space<vmem>>, vector<32x48xbf16>
    %cst = arith.constant dense<0.000000e+00> : vector<8x48xf32>
    %5 = tpu.matmul %3, %4, %cst {dimension_numbers = #tpu.dot_dimension_numbers<[1], [0], [0], [1], [0, 0, 1, 1], [], []>} : vector<8x32xbf16>, vector<32x48xbf16>, vector<8x48xf32> -> vector<8x48xf32>
    %cst_4 = arith.constant dense<0.000000e+00> : vector<48xf32>
    %6 = vector.multi_reduction <add>, %5, %cst_4 [0] : vector<8x48xf32> to vector<48xf32>
    %7 = vector.shape_cast %6 : vector<48xf32> to vector<1x48xf32>
    %cst_5 = arith.constant 1.250000e-01 : f32
    %8 = vector.broadcast %cst_5 : f32 to vector<1x48xf32>
    %9 = arith.mulf %7, %8 : vector<1x48xf32>
    %10 = vector.broadcast %9 : vector<1x48xf32> to vector<8x48xf32>
    %11 = arith.subf %5, %10 : vector<8x48xf32>
    %12 = arith.mulf %11, %11 : vector<8x48xf32>
    %cst_6 = arith.constant dense<0.000000e+00> : vector<48xf32>
    %13 = vector.multi_reduction <add>, %12, %cst_6 [0] : vector<8x48xf32> to vector<48xf32>
    %14 = vector.shape_cast %13 : vector<48xf32> to vector<1x48xf32>
    %cst_7 = arith.constant 1.250000e-01 : f32
    %15 = vector.broadcast %cst_7 : f32 to vector<1x48xf32>
    %16 = arith.mulf %14, %15 : vector<1x48xf32>
    %cst_8 = arith.constant 9.99999974E-6 : f32
    %17 = vector.broadcast %cst_8 : f32 to vector<1x48xf32>
    %18 = arith.addf %16, %17 : vector<1x48xf32>
    %19 = math.rsqrt %18 : vector<1x48xf32>
    %c0_9 = arith.constant 0 : index
    %c0_10 = arith.constant 0 : index
    %20 = vector.load %arg3[%c0_9, %c0_10] : memref<1x48xf32, #tpu.memory_space<vmem>>, vector<1x48xf32>
    %c0_11 = arith.constant 0 : index
    %c0_12 = arith.constant 0 : index
    %21 = vector.load %arg4[%c0_11, %c0_12] : memref<1x48xf32, #tpu.memory_space<vmem>>, vector<1x48xf32>
    %22 = arith.mulf %20, %19 : vector<1x48xf32>
    %23 = vector.broadcast %22 : vector<1x48xf32> to vector<8x48xf32>
    %24 = arith.mulf %11, %23 : vector<8x48xf32>
    %25 = vector.broadcast %21 : vector<1x48xf32> to vector<8x48xf32>
    %26 = arith.addf %24, %25 : vector<8x48xf32>
    %cst_13 = arith.constant 0.000000e+00 : f32
    %27 = vector.broadcast %cst_13 : f32 to vector<8x48xf32>
    %28 = arith.maximumf %26, %27 : vector<8x48xf32>
    %c0_14 = arith.constant 0 : index
    %c0_15 = arith.constant 0 : index
    %29 = vector.load %arg7[%c0_14, %c0_15] : memref<8x32xf32, #tpu.memory_space<vmem>>, vector<8x32xf32>
    %30 = arith.truncf %28 : vector<8x48xf32> to vector<8x48xbf16>
    %c0_16 = arith.constant 0 : index
    %c0_17 = arith.constant 0 : index
    %31 = vector.load %arg5[%c0_16, %c0_17] : memref<48x32xbf16, #tpu.memory_space<vmem>>, vector<48x32xbf16>
    %cst_18 = arith.constant dense<0.000000e+00> : vector<8x32xf32>
    %32 = tpu.matmul %30, %31, %cst_18 {dimension_numbers = #tpu.dot_dimension_numbers<[1], [0], [0], [1], [0, 0, 1, 1], [], []>} : vector<8x48xbf16>, vector<48x32xbf16>, vector<8x32xf32> -> vector<8x32xf32>
    %33 = arith.addf %29, %32 : vector<8x32xf32>
    %c0_19 = arith.constant 0 : index
    %c0_20 = arith.constant 0 : index
    %34 = vector.load %arg7[%c0_19, %c0_20] : memref<8x32xf32, #tpu.memory_space<vmem>>, vector<8x32xf32>
    tpu.vector_store %arg7[%c0_19, %c0_20], %33 {strides = array<i32>} : memref<8x32xf32, #tpu.memory_space<vmem>>, vector<8x32xf32>,
    %c0_i32_21 = arith.constant 0 : i32
    %35 = arith.cmpi eq, %arg0, %c0_i32_21 : i32
    %36 = arith.extui %35 : i1 to i32
    %c0_i32_22 = arith.constant 0 : i32
    %37 = arith.cmpi ne, %36, %c0_i32_22 : i32
    scf.if %37 {
      %c0_23 = arith.constant 0 : index
      %c0_24 = arith.constant 0 : index
      %38 = vector.load %arg7[%c0_23, %c0_24] : memref<8x32xf32, #tpu.memory_space<vmem>>, vector<8x32xf32>
      %c0_25 = arith.constant 0 : index
      %c0_26 = arith.constant 0 : index
      %39 = vector.load %arg6[%c0_25, %c0_26] : memref<1x32xf32, #tpu.memory_space<vmem>>, vector<1x32xf32>
      %40 = vector.broadcast %39 : vector<1x32xf32> to vector<8x32xf32>
      %41 = arith.addf %38, %40 : vector<8x32xf32>
      %c0_27 = arith.constant 0 : index
      %c0_28 = arith.constant 0 : index
      %42 = vector.load %arg7[%c0_27, %c0_28] : memref<8x32xf32, #tpu.memory_space<vmem>>, vector<8x32xf32>
      tpu.vector_store %arg7[%c0_27, %c0_28], %41 {strides = array<i32>} : memref<8x32xf32, #tpu.memory_space<vmem>>, vector<8x32xf32>,
    } else {
    }
    return
  }
  func.func @transform_0(%arg0: i32) -> (i32, i32) {
    %c0_i32 = arith.constant 0 : i32
    %c0_i32_0 = arith.constant 0 : i32
    %c0_i32_1 = arith.constant 0 : i32
    return %c0_i32, %c0_i32_0 : i32, i32
  }
  func.func @transform_1(%arg0: i32) -> (i32, i32) {
    %c0_i32 = arith.constant 0 : i32
    %c0_i32_0 = arith.constant 0 : i32
    return %c0_i32, %arg0 : i32, i32
  }
  func.func @transform_2(%arg0: i32) -> (i32, i32) {
    %c0_i32 = arith.constant 0 : i32
    %c0_i32_0 = arith.constant 0 : i32
    %c0_i32_1 = arith.constant 0 : i32
    return %c0_i32, %c0_i32_0 : i32, i32
  }
  func.func @transform_3(%arg0: i32) -> (i32, i32) {
    %c0_i32 = arith.constant 0 : i32
    %c0_i32_0 = arith.constant 0 : i32
    %c0_i32_1 = arith.constant 0 : i32
    return %c0_i32, %c0_i32_0 : i32, i32
  }
  func.func @transform_4(%arg0: i32) -> (i32, i32) {
    %c0_i32 = arith.constant 0 : i32
    %c0_i32_0 = arith.constant 0 : i32
    return %arg0, %c0_i32 : i32, i32
  }
  func.func @transform_5(%arg0: i32) -> (i32, i32) {
    %c0_i32 = arith.constant 0 : i32
    %c0_i32_0 = arith.constant 0 : i32
    %c0_i32_1 = arith.constant 0 : i32
    return %c0_i32, %c0_i32_0 : i32, i32
  }
  func.func @transform_6(%arg0: i32) -> (i32, i32) {
    %c0_i32 = arith.constant 0 : i32
    %c0_i32_0 = arith.constant 0 : i32
    %c0_i32_1 = arith.constant 0 : i32
    return %c0_i32, %c0_i32_0 : i32, i32
  }
}

</mosaic_0001>

<llo_original>
// kernel: tpu_custom_call.1
$region0: #{tpu_custom_call.1}
  #allocation0 [shape = 'u32[]', space=smem, size = 0x4, offset = 0x4, fixed_abs, tag = 'smem constant byte address 0x4 - core index']
  #allocation1 [shape = 'u32[144,128]{1,0:T(1,128)}', space=vmem, size = 0x12000, scoped, tag = 'internal scratch']
  %s0 = inlined_call_operand.vmem [shape: bf16[8,32], index: 0, kind: input, shape index: {}]
  %s1 = inlined_call_operand.vmem [shape: bf16[32,48], index: 1, kind: input, shape index: {}]
  %s2 = inlined_call_operand.vmem [shape: f32[1,48], index: 2, kind: input, shape index: {}]
  %s3 = inlined_call_operand.vmem [shape: f32[1,48], index: 3, kind: input, shape index: {}]
  %s4 = inlined_call_operand.vmem [shape: bf16[48,32], index: 4, kind: input, shape index: {}]
  %s5 = inlined_call_operand.vmem [shape: f32[1,32], index: 5, kind: input, shape index: {}]
  %s6 = inlined_call_operand.hbm [shape: f32[8,32], index: 6, kind: output, shape index: {}]
  %s7 = sld [smem:[#allocation0]]
  $region42: #{tpu_custom_call.1} parent=0
    _
  %s9 = ssub.s32 1, %s7
  %s10 = scalar_select 0, %s9, %s7
  $region1: #{tpu_custom_call.1} parent=0
    #allocation2 [shape = 'u8[4096]{0}', space=vmem, size = 0x1000, scoped, tag = 'output window, operand 0, single buffered']
    #allocation3 [shape = 's32[1]{0}', space=sflag, size = 0x4, scoped, tag = 'scoped memory for tpu_custom_call.1']
    %11 = vsyncpa [#allocation3], 0
    // Predicated region
    $region2: #{tpu_custom_call.1} parent=1 // pred_check
      _
    $region3: #{tpu_custom_call.1} parent=1 // pred_check_branch
      %13 = sbr.rel (0) target = $region5
    $region4: #{tpu_custom_call.1} parent=1 // pred_region
      _
    $region5: #{tpu_custom_call.1} parent=1 // pred_fallthru
      _
    // Predicated region
    $region6: #{tpu_custom_call.1} parent=1 // pred_check
      _
    $region7: #{tpu_custom_call.1} parent=1 // pred_check_branch
      %15 = sbr.rel (0) target = $region9
    $region8: #{tpu_custom_call.1} parent=1 // pred_region
      _
    $region9: #{tpu_custom_call.1} parent=1 // pred_fallthru
      _
    // Predicated region
    $region10: #{tpu_custom_call.1} parent=1 // pred_check
      _
    $region11: #{tpu_custom_call.1} parent=1 // pred_check_branch
      %17 = sbr.rel (0) target = $region13
    $region12: #{tpu_custom_call.1} parent=1 // pred_region
      _
    $region13: #{tpu_custom_call.1} parent=1 // pred_fallthru
      _
    // Predicated region
    $region14: #{tpu_custom_call.1} parent=1 // pred_check
      _
    $region15: #{tpu_custom_call.1} parent=1 // pred_check_branch
      %19 = sbr.rel (0) target = $region17
    $region16: #{tpu_custom_call.1} parent=1 // pred_region
      _
    $region17: #{tpu_custom_call.1} parent=1 // pred_fallthru
      _
    // Predicated region
    $region18: #{tpu_custom_call.1} parent=1 // pred_check
      _
    $region19: #{tpu_custom_call.1} parent=1 // pred_check_branch
      %21 = sbr.rel (0) target = $region21
    $region20: #{tpu_custom_call.1} parent=1 // pred_region
      _
    $region21: #{tpu_custom_call.1} parent=1 // pred_fallthru
      _
    // Predicated region
    $region22: #{tpu_custom_call.1} parent=1 // pred_check
      _
    $region23: #{tpu_custom_call.1} parent=1 // pred_check_branch
      %23 = sbr.rel (0) target = $region25
    $region24: #{tpu_custom_call.1} parent=1 // pred_region
      _
    $region25: #{tpu_custom_call.1} parent=1 // pred_fallthru
      _
    %p25 = scmp.eq.s32.totalorder 0, 0
    // Predicated region
    $region26: #{tpu_custom_call.1} parent=1 // pred_check
      %p26 = pneg %p25
    $region27: #{tpu_custom_call.1} parent=1 // pred_check_branch
      %28 = sbr.rel (%p26) target = $region29
    $region28: #{tpu_custom_call.1} parent=1 // pred_region
      %vm29 = vcmask 261120
      %30 = vst.msk [vmem:[#allocation2] sm:$0xff] %vm29, 0.0
    $region29: #{tpu_custom_call.1} parent=1 // pred_fallthru
      _
    %v31 = vld [vmem:[%s0] sm:$0xf]
    %v32 = vld [vmem:[%s1] sm:$0xf]
    %v33 = vld [vmem:[%s1 + $0x4] sm:$0xf]
    %v34 = vld [vmem:[%s1 + $0x8] sm:$0xf]
    %v35 = vld [vmem:[%s1 + $0xc] sm:$0xf]
    %v40 = vunpack.c.l.b16 %v32
    %v41 = vunpack.c.l.b16 %v33
    %v42 = vunpack.c.l.b16 %v34
    %v43 = vunpack.c.l.b16 %v35
    %v44 = vpack.c.b16 %v41, %v40
    %v45 = vpack.c.b16 %v43, %v42
    %vm48 = vcmask 261120
    %v50 = vsel %vm48, %v31, 0
    %52 = vmatprep.subr.bf16.mxu0 0
    %53 = vmatpush1.bf16.msra.mxu0 %v44
    %54 = vmatprep.subr.bf16.mxu0 0
    %55 = vmatpush1.bf16.msra.mxu0 %v45
    %56 = vmatprep.subr.bf16.mxu0 0
    %57 = vmatpush1.bf16.msra.mxu0 0
    %58 = vmatprep.subr.bf16.mxu0 0
    %59 = vmatpush1.bf16.msra.mxu0 0
    %60 = vmatprep.subr.bf16.mxu0 0
    %61 = vmatpush1.bf16.msra.mxu0 0
    %62 = vmatprep.subr.bf16.mxu0 0
    %63 = vmatpush1.bf16.msra.mxu0 0
    %64 = vmatprep.subr.bf16.mxu0 0
    %65 = vmatpush1.bf16.msra.mxu0 0
    %66 = vmatprep.subr.bf16.mxu0 0
    %67 = vmatpush1.bf16.msra.mxu0 0
    %68 = vmatprep.subr.bf16.mxu0 0
    %69 = vmatpush1.bf16.msra.mxu0 0
    %70 = vmatprep.subr.bf16.mxu0 0
    %71 = vmatpush1.bf16.msra.mxu0 0
    %72 = vmatprep.subr.bf16.mxu0 0
    %73 = vmatpush1.bf16.msra.mxu0 0
    %74 = vmatprep.subr.bf16.mxu0 0
    %75 = vmatpush1.bf16.msra.mxu0 0
    %76 = vmatprep.subr.bf16.mxu0 0
    %77 = vmatpush1.bf16.msra.mxu0 0
    %78 = vmatprep.subr.bf16.mxu0 0
    %79 = vmatpush1.bf16.msra.mxu0 0
    %80 = vmatprep.subr.bf16.mxu0 0
    %81 = vmatpush1.bf16.msra.mxu0 0
    %82 = vmatprep.subr.bf16.mxu0 0
    %83 = vmatpush1.bf16.msra.mxu0 0
    %84 = vmatprep.mubr.bf16.mxu0 0
    %85 = vmatmul.mubr.bf16.gmra.mrb[0].mxu0 %v50
    %v86 = vpop.f32.mrb[0].mxu0
    %v87 = vadd.f32 0.0, %v86
    %v88 = vpop.f32.mrb[0].mxu0
    %v89 = vpop.f32.mrb[0].mxu0
    %v90 = vpop.f32.mrb[0].mxu0
    %91 = vdwg.mxu0
    %vm92 = vcmask 392192
    %v93 = vsel %vm92, %v87, 0.0
    %v94 = vrot.slane %v93, 4
    %v95 = vadd.f32 %v93, %v94
    %v96 = vrot.slane %v95, 2
    %v97 = vadd.f32 %v95, %v96
    %v98 = vrot.slane %v97, 1
    %v99 = vadd.f32 %v97, %v98
    %v100 = vmul.f32 %v99, 0.125
    %v101 = vsub.f32 %v87, %v100
    %v102 = vmul.f32 %v101, %v101
    %v103 = vsel %vm92, %v102, 0.0
    %v104 = vrot.slane %v103, 4
    %v105 = vadd.f32 %v103, %v104
    %v106 = vrot.slane %v105, 2
    %v107 = vadd.f32 %v105, %v106
    %v108 = vrot.slane %v107, 1
    %v109 = vadd.f32 %v107, %v108
    %v110 = vmul.f32 %v109, 0.125
    %v111 = vadd.f32 %v110, 1e-05
    %v112 = vrsqrt.pop %v111
    %v113 = vld [vmem:[%s2] sm:$0x1]
    %v114 = vld [vmem:[%s3] sm:$0x1]
    %v115 = vmul.f32 %v113, %v112
    %v117 = vlaneseq
    %v118 = vshrl.u32 %v117, 7
    %v119 = vsub.s32 0, %v118
    %v120 = vrot.slane %v115, %v119
    %v122 = vmul.f32 %v101, %v120
    %v124 = vlaneseq
    %v125 = vshrl.u32 %v124, 7
    %v126 = vsub.s32 0, %v125
    %v127 = vrot.slane %v114, %v126
    %v129 = vadd.f32 %v122, %v127
    %v130 = vmax.f32 %v129, 0.0
    %v131 = vld [vmem:[#allocation2] sm:$0xff]
    %v132 = vpack.c.bf16 %v130, %v130
    %v133 = vld [vmem:[%s4] sm:$0xf]
    %v134 = vld [vmem:[%s4 + $0x4] sm:$0xf]
    %v135 = vld [vmem:[%s4 + $0x8] sm:$0xf]
    %v136 = vld [vmem:[%s4 + $0xc] sm:$0xf]
    %v137 = vld [vmem:[%s4 + $0x10] sm:$0xf]
    %v138 = vld [vmem:[%s4 + $0x14] sm:$0xf]
    %v145 = vunpack.c.l.b16 %v133
    %v146 = vunpack.c.l.b16 %v134
    %v147 = vunpack.c.l.b16 %v135
    %v148 = vunpack.c.l.b16 %v136
    %v149 = vunpack.c.l.b16 %v137
    %v150 = vunpack.c.l.b16 %v138
    %v151 = vpack.c.b16 %v146, %v145
    %v152 = vpack.c.b16 %v148, %v147
    %v153 = vpack.c.b16 %v150, %v149
    %v158 = vsel %vm92, %v132, 0
    %160 = vmatprep.subr.bf16.mxu0 0
    %161 = vmatpush1.bf16.msra.mxu0 %v151
    %162 = vmatprep.subr.bf16.mxu0 0
    %163 = vmatpush1.bf16.msra.mxu0 %v152
    %164 = vmatprep.subr.bf16.mxu0 0
    %165 = vmatpush1.bf16.msra.mxu0 %v153
    %166 = vmatprep.subr.bf16.mxu0 0
    %167 = vmatpush1.bf16.msra.mxu0 0
    %168 = vmatprep.subr.bf16.mxu0 0
    %169 = vmatpush1.bf16.msra.mxu0 0
    %170 = vmatprep.subr.bf16.mxu0 0
    %171 = vmatpush1.bf16.msra.mxu0 0
    %172 = vmatprep.subr.bf16.mxu0 0
    %173 = vmatpush1.bf16.msra.mxu0 0
    %174 = vmatprep.subr.bf16.mxu0 0
    %175 = vmatpush1.bf16.msra.mxu0 0
    %176 = vmatprep.subr.bf16.mxu0 0
    %177 = vmatpush1.bf16.msra.mxu0 0
    %178 = vmatprep.subr.bf16.mxu0 0
    %179 = vmatpush1.bf16.msra.mxu0 0
    %180 = vmatprep.subr.bf16.mxu0 0
    %181 = vmatpush1.bf16.msra.mxu0 0
    %182 = vmatprep.subr.bf16.mxu0 0
    %183 = vmatpush1.bf16.msra.mxu0 0
    %184 = vmatprep.subr.bf16.mxu0 0
    %185 = vmatpush1.bf16.msra.mxu0 0
    %186 = vmatprep.subr.bf16.mxu0 0
    %187 = vmatpush1.bf16.msra.mxu0 0
    %188 = vmatprep.subr.bf16.mxu0 0
    %189 = vmatpush1.bf16.msra.mxu0 0
    %190 = vmatprep.subr.bf16.mxu0 0
    %191 = vmatpush1.bf16.msra.mxu0 0
    %192 = vmatprep.mubr.bf16.mxu0 0
    %193 = vmatmul.mubr.bf16.gmra.mrb[0].mxu0 %v158
    %v194 = vpop.f32.mrb[0].mxu0
    %v195 = vadd.f32 0.0, %v194
    %v196 = vpop.f32.mrb[0].mxu0
    %v197 = vpop.f32.mrb[0].mxu0
    %v198 = vpop.f32.mrb[0].mxu0
    %199 = vdwg.mxu0
    %v200 = vadd.f32 %v131, %v195
    %201 = vst.msk [vmem:[#allocation2] sm:$0xff] %vm48, %v200
    // Predicated region
    $region30: #{tpu_custom_call.1} parent=1 // pred_check
      %p202 = pneg %p25
    $region31: #{tpu_custom_call.1} parent=1 // pred_check_branch
      %204 = sbr.rel (%p202) target = $region33
    $region32: #{tpu_custom_call.1} parent=1 // pred_region
      %v205 = vld [vmem:[#allocation2] sm:$0xff]
      %v206 = vld [vmem:[%s5] sm:$0x1]
      %v208 = vlaneseq
      %v209 = vshrl.u32 %v208, 7
      %v210 = vsub.s32 0, %v209
      %v211 = vrot.slane %v206, %v210
      %v213 = vadd.f32 %v205, %v211
      %214 = vst.msk [vmem:[#allocation2] sm:$0xff] %vm48, %v213
    $region33: #{tpu_custom_call.1} parent=1 // pred_fallthru
      _
    // Predicated region
    $region34: #{tpu_custom_call.1} parent=1 // pred_check
      _
    $region35: #{tpu_custom_call.1} parent=1 // pred_check_branch
      %216 = sbr.rel (0) target = $region37
    $region36: #{tpu_custom_call.1} parent=1 // pred_region
      %s218 = ssub.s32 128, 128
      %219 = vsyncadd [#allocation3], %s218
      %s221 = sshll.u32 [#allocation2], 4
      %s222 = int_to_ptr.vmem [resolvable:$true] %s221
      %224 = dma.vmem_to_hbm [thread:$0]  %s222, 128, %s6, [#allocation3]
    $region37: #{tpu_custom_call.1} parent=1 // pred_fallthru
      _
    // Predicated region
    $region38: #{tpu_custom_call.1} parent=1 // pred_check
      _
    $region39: #{tpu_custom_call.1} parent=1 // pred_check_branch
      %226 = sbr.rel (0) target = $region41
    $region40: #{tpu_custom_call.1} parent=1 // pred_region
      %227 = dma.done [#allocation3], 128
    $region41: #{tpu_custom_call.1} parent=1 // pred_fallthru
      _
    %228 = vsyncpa [#allocation3], 1

</llo_original>
